<compile_context>
chip_gen: v7x
topology: tpu7x:2x2x1
jax: 0.10.0
libtpu: 0.0.40
codegen_flags: <defaults>
</compile_context>

<pallas_src>
import math
import functools

import jax
import jax.numpy as jnp
import numpy as np
from jax.experimental import pallas as pl
from jax.experimental.pallas import tpu as pltpu


# ----------------------------------------------------------------------------
# Fused Pallas kernel: (enc+qkv proj) -> MHA -> (out proj + decoder)
# ----------------------------------------------------------------------------
def _fused_timevar_kp_kernel(res_ref, wa_ref, wb_ref, out_ref, *, S, NP, EP, SEGC):
    """Single invocation (no grid); all intermediates live in VMEM / vregs.

    res:  (S*NP, SEGC)    rows ordered (seq i, attn-batch n), n padded to NP
    wa:   (SEGC+8, 3*EP)  rows [0:SEGC] fused W_qkv, row SEGC fused b_qkv;
                          q/k/v blocks each padded to EP=128 lanes, q pre-scaled
    wb:   (3*EP+8, 128)   rows [0:EP] W_od (out_proj folded into decoder),
                          [EP:2EP] seg, [2EP:3EP] seg.T, row 3EP b_od
    out:  (S*NP, 128)     lane-dense; logical (segC) slice done outside
    """
    f32 = jnp.float32

    # ---- static views into the packed weight slabs (tile-aligned row starts) ----
    W_qkv = wa_ref[0:SEGC, :]                 # (SEGC, 3*EP)
    b_qkv = wa_ref[SEGC:SEGC + 1, :]          # (1, 3*EP)
    W_od  = wb_ref[0:EP, :]                   # (EP, 128)
    seg   = wb_ref[EP:2 * EP, :]              # (EP, 128)  lane -> head (padded)
    seg_t = wb_ref[2 * EP:3 * EP, :]          # (128, EP)  head -> lane (padded)
    b_od  = wb_ref[3 * EP:3 * EP + 1, :]      # (1, 128)

    # ---- fused encoder + qkv projection: ONE MXU matmul ----
    qkv = jnp.dot(res_ref[...], W_qkv, preferred_element_type=f32) + b_qkv   # (S*NP, 3*EP)
    q = qkv[:, 0:EP]            # 128-lane aligned slices (no lane rotates)
    k = qkv[:, EP:2 * EP]       # q already scaled by 1/sqrt(Dh) via the weights
    v = qkv[:, 2 * EP:3 * EP]

    # ---- multi-head attention: loop over key seq position j only (2*S matmuls) ----
    # rows are (i*NP + n); attention is independent per (n, head); padded
    # rows/lanes/heads carry exact zeros and are discarded outside.
    s, vb = [], []
    for j in range(S):
        kj = k[j * NP:(j + 1) * NP, :]                    # (NP, EP), 8-aligned block
        vj = v[j * NP:(j + 1) * NP, :]
        if S > 1:                                          # tile across the S query blocks
            kj = jnp.concatenate([kj] * S, axis=0)        # (S*NP, EP), full-tile copies
            vj = jnp.concatenate([vj] * S, axis=0)
        vb.append(vj)
        s.append(jnp.dot(q * kj, seg, preferred_element_type=f32))   # (S*NP, 128) per-head

    m = s[0]
    for j in range(1, S):
        m = jnp.maximum(m, s[j])
    p = [jnp.exp(sj - m) for sj in s]
    denom = p[0]
    for j in range(1, S):
        denom = denom + p[j]
    # exact reciprocal: approx=True (~2^-12 rel err) would brush the 1e-4 tolerance
    inv = pl.reciprocal(denom)

    o = None
    for j in range(S):
        w_full = jnp.dot(p[j] * inv, seg_t, preferred_element_type=f32)  # (S*NP, EP)
        term = w_full * vb[j]
        o = term if o is None else o + term

    # ---- fused out-projection + decoder: ONE MXU matmul, lane-dense store ----
    out_ref[...] = (jnp.dot(o, W_od, preferred_element_type=f32) + b_od).astype(out_ref.dtype)


# ----------------------------------------------------------------------------
# Parameter prep: fold linears, fold attention scale, pack into 2 padded slabs
# ----------------------------------------------------------------------------
def prepare_params(params, *, seg_len, enc_in, dynamic_dim, num_heads):
    E, H = dynamic_dim, num_heads
    Dh = E // H
    segC = seg_len * enc_in
    EP = 128                                   # padded embed width (lane tile)
    assert E <= EP and H <= EP and segC <= 128
    scale = 1.0 / math.sqrt(Dh)

    enc_w = np.asarray(params["enc_w"], np.float32)       # (E, segC)
    enc_b = np.asarray(params["enc_b"], np.float32)       # (E,)
    in_w  = np.asarray(params["in_proj_w"], np.float32)   # (3E, E)
    in_b  = np.asarray(params["in_proj_b"], np.float32)   # (3E,)
    out_w = np.asarray(params["out_proj_w"], np.float32)  # (E, E)
    out_b = np.asarray(params["out_proj_b"], np.float32)  # (E,)
    dec_w = np.asarray(params["dec_w"], np.float32)       # (segC, E)
    dec_b = np.asarray(params["dec_b"], np.float32)       # (segC,)

    # fold encoder into the qkv projection; fold 1/sqrt(Dh) into the q block
    W_qkv = enc_w.T @ in_w.T                               # (segC, 3E)
    b_qkv = enc_b @ in_w.T + in_b                          # (3E,)
    W_qkv[:, :E] *= scale
    b_qkv[:E] *= scale

    # fold the attention out-projection into the decoder
    W_od = out_w.T @ dec_w.T                               # (E, segC)
    b_od = out_b @ dec_w.T + dec_b                         # (segC,)

    # slab A: fused qkv weight + bias, q/k/v each padded to a 128-lane block
    slab_a = np.zeros((segC + 8, 3 * EP), np.float32)
    for j in range(3):
        slab_a[:segC, j * EP:j * EP + E] = W_qkv[:, j * E:(j + 1) * E]
        slab_a[segC, j * EP:j * EP + E] = b_qkv[j * E:(j + 1) * E]

    # slab B: W_od (+bias) and the head-segment matrices, all 128 lanes wide
    seg = np.zeros((EP, EP), np.float32)
    for h in range(H):
        seg[h * Dh:(h + 1) * Dh, h] = 1.0
    slab_b = np.zeros((3 * EP + 8, 128), np.float32)
    slab_b[:E, :segC] = W_od
    slab_b[EP:2 * EP, :] = seg
    slab_b[2 * EP:3 * EP, :] = seg.T
    slab_b[3 * EP, :segC] = b_od

    return jnp.asarray(slab_a), jnp.asarray(slab_b)


# ----------------------------------------------------------------------------
# TimeVarKP forward (multistep=False -> KPLayer dynamics)
# ----------------------------------------------------------------------------
def timevar_kp_forward(x, slab_a, slab_b, *, input_len, pred_len, seg_len, enc_in,
                       dynamic_dim, num_heads):
    del dynamic_dim, num_heads  # baked into the slabs
    B, L, C = x.shape
    freq = math.ceil(input_len / seg_len)
    step = math.ceil(pred_len / seg_len)
    padding_len = seg_len * freq - input_len
    segC = seg_len * enc_in
    EP, NP = 128, 8
    assert freq <= NP

    # pad by repeating the tail, segment, pad freq -> NP rows per batch:
    # (B*NP, segC).  allow_input_fusion lets XLA fuse this producer into the call.
    res = jnp.concatenate([x[:, L - padding_len:, :], x], axis=1)      # (B, freq*seg, C)
    res = res.reshape(B, freq, segC)
    res = jnp.pad(res, ((0, 0), (0, NP - freq), (0, 0)))
    res = res.reshape(B * NP, segC)

    kernel = functools.partial(_fused_timevar_kp_kernel, S=B, NP=NP, EP=EP, SEGC=segC)
    vmem = lambda: pl.BlockSpec(memory_space=pltpu.MemorySpace.VMEM)

    out = pl.pallas_call(
        kernel,
        out_shape=jax.ShapeDtypeStruct((B * NP, 128), jnp.float32),
        in_specs=[vmem(), vmem(), vmem()],
        out_specs=vmem(),
        compiler_params=pltpu.CompilerParams(
            allow_input_fusion=[True, False, False]),
    )(res, slab_a, slab_b)

    out = out.reshape(B, NP, 128)
    x_rec_seg = out[:, :freq, :segC]                                   # (B, freq, segC)
    x_rec = x_rec_seg.reshape(B, freq * seg_len, enc_in)[:, :input_len, :]

    # prediction: attention batches (freq axis) are independent and there is no
    # mask/dropout, so z_pred_one == z_rec[:, -1:] and the decoder commutes with
    # that slice -> x_pred is the last decoded segment tiled `step` times.
    x_pred_one = x_rec_seg[:, freq - 1, :]                             # (B, segC)
    x_pred = jnp.broadcast_to(x_pred_one[:, None, :], (B, step, segC))
    x_pred = x_pred.reshape(B, step * seg_len, enc_in)[:, :pred_len, :]
    return x_rec, x_pred


# ----------------------------------------------------------------------------
# Pure-JAX reference (mirrors the PyTorch module exactly, unfolded weights)
# ----------------------------------------------------------------------------
def _ref_mha(x, in_w, in_b, out_w, out_b, num_heads):
    S, N, E = x.shape
    Dh = E // num_heads
    qkv = x @ in_w.T + in_b
    q, k, v = jnp.split(qkv, 3, axis=-1)

    def heads(t):
        return t.reshape(S, N * num_heads, Dh).transpose(1, 0, 2)

    q, k, v = heads(q) / math.sqrt(Dh), heads(k), heads(v)
    a = jax.nn.softmax(q @ k.transpose(0, 2, 1), axis=-1)
    o = (a @ v).transpose(1, 0, 2).reshape(S * N, E)
    return (o @ out_w.T + out_b).reshape(S, N, E)


def _ref_forward(x, params, *, input_len, pred_len, seg_len, enc_in,
                 dynamic_dim, num_heads):
    B, L, C = x.shape
    freq = math.ceil(input_len / seg_len)
    step = math.ceil(pred_len / seg_len)
    padding_len = seg_len * freq - input_len
    res = jnp.concatenate([x[:, L - padding_len:, :], x], axis=1)
    res = res.reshape(B, freq, seg_len * C)
    z = res @ params["enc_w"].T + params["enc_b"]
    mha = (params["in_proj_w"], params["in_proj_b"],
           params["out_proj_w"], params["out_proj_b"])
    z_rec = _ref_mha(z, *mha, num_heads)
    z_pred = jnp.concatenate([_ref_mha(z[:, -1:, :], *mha, num_heads)] * step, axis=1)
    x_rec = (z_rec @ params["dec_w"].T + params["dec_b"])
    x_rec = x_rec.reshape(B, freq * seg_len, enc_in)[:, :input_len, :]
    x_pred = (z_pred @ params["dec_w"].T + params["dec_b"])
    x_pred = x_pred.reshape(B, step * seg_len, enc_in)[:, :pred_len, :]
    return x_rec, x_pred


# ----------------------------------------------------------------------------
# Main
# ----------------------------------------------------------------------------
if __name__ == "__main__":
    B = 2
    enc_in = 4
    input_len = 20
    pred_len = 12
    seg_len = 8
    dynamic_dim = 64          # embed_dim of the attention
    num_heads = 8             # nn.MultiheadAttention(embed_dim, num_heads=8)

    key = jax.random.PRNGKey(0)
    ks = jax.random.split(key, 8)

    # deterministic synthetic parameters (PyTorch weight layouts: (out, in))
    params = {
        "enc_w":      0.1 * jax.random.normal(ks[0], (dynamic_dim, seg_len * enc_in), jnp.float32),
        "enc_b":      0.1 * jax.random.normal(ks[1], (dynamic_dim,), jnp.float32),
        "dec_w":      0.1 * jax.random.normal(ks[2], (seg_len * enc_in, dynamic_dim), jnp.float32),
        "dec_b":      0.1 * jax.random.normal(ks[3], (seg_len * enc_in,), jnp.float32),
        "in_proj_w":  0.1 * jax.random.normal(ks[4], (3 * dynamic_dim, dynamic_dim), jnp.float32),
        "in_proj_b":  0.1 * jax.random.normal(ks[5], (3 * dynamic_dim,), jnp.float32),
        "out_proj_w": 0.1 * jax.random.normal(ks[6], (dynamic_dim, dynamic_dim), jnp.float32),
        "out_proj_b": 0.1 * jax.random.normal(ks[7], (dynamic_dim,), jnp.float32),
    }

    x = jax.random.normal(jax.random.PRNGKey(1), (B, input_len, enc_in), jnp.float32)

    # fold / transpose / pad / pack weights ONCE, outside the jitted forward
    slab_a, slab_b = prepare_params(params, seg_len=seg_len, enc_in=enc_in,
                                    dynamic_dim=dynamic_dim, num_heads=num_heads)

    fwd = jax.jit(functools.partial(
        timevar_kp_forward,
        input_len=input_len, pred_len=pred_len, seg_len=seg_len,
        enc_in=enc_in, dynamic_dim=dynamic_dim, num_heads=num_heads))

    x_rec, x_pred = fwd(x, slab_a, slab_b)
    jax.block_until_ready((x_rec, x_pred))

    # sanity: compare against pure-JAX reference of the PyTorch module
    r_rec, r_pred = _ref_forward(
        x, params, input_len=input_len, pred_len=pred_len, seg_len=seg_len,
        enc_in=enc_in, dynamic_dim=dynamic_dim, num_heads=num_heads)
    assert x_rec.shape == (B, input_len, enc_in)
    assert x_pred.shape == (B, pred_len, enc_in)
    np.testing.assert_allclose(np.asarray(x_rec), np.asarray(r_rec), rtol=1e-4, atol=1e-4)
    np.testing.assert_allclose(np.asarray(x_pred), np.asarray(r_pred), rtol=1e-4, atol=1e-4)

    print("KERNEL_OK")
</pallas_src>

<mosaic_0001>
module attributes {stable_mosaic.version = 11 : i64} {
  func.func @_fused_timevar_kp_kernel(%arg0: memref<16x32xf32, #tpu.memory_space<vmem>>, %arg1: memref<40x384xf32, #tpu.memory_space<vmem>>, %arg2: memref<392x128xf32, #tpu.memory_space<vmem>>, %arg3: memref<16x128xf32, #tpu.memory_space<vmem>>) attributes {dimension_semantics = [], scalar_prefetch = 0 : i64, scratch_operands = 0 : i64, tpu.core_type = #tpu.core_type<tc>} {
    %c0 = arith.constant 0 : index
    %c0_0 = arith.constant 0 : index
    %0 = vector.load %arg1[%c0, %c0_0] : memref<40x384xf32, #tpu.memory_space<vmem>>, vector<32x384xf32>
    %c32 = arith.constant 32 : index
    %c0_1 = arith.constant 0 : index
    %1 = vector.load %arg1[%c32, %c0_1] : memref<40x384xf32, #tpu.memory_space<vmem>>, vector<1x384xf32>
    %c0_2 = arith.constant 0 : index
    %c0_3 = arith.constant 0 : index
    %2 = vector.load %arg2[%c0_2, %c0_3] : memref<392x128xf32, #tpu.memory_space<vmem>>, vector<128x128xf32>
    %c128 = arith.constant 128 : index
    %c0_4 = arith.constant 0 : index
    %3 = vector.load %arg2[%c128, %c0_4] : memref<392x128xf32, #tpu.memory_space<vmem>>, vector<128x128xf32>
    %c256 = arith.constant 256 : index
    %c0_5 = arith.constant 0 : index
    %4 = vector.load %arg2[%c256, %c0_5] : memref<392x128xf32, #tpu.memory_space<vmem>>, vector<128x128xf32>
    %c384 = arith.constant 384 : index
    %c0_6 = arith.constant 0 : index
    %5 = vector.load %arg2[%c384, %c0_6] : memref<392x128xf32, #tpu.memory_space<vmem>>, vector<1x128xf32>
    %c0_7 = arith.constant 0 : index
    %c0_8 = arith.constant 0 : index
    %6 = vector.load %arg0[%c0_7, %c0_8] : memref<16x32xf32, #tpu.memory_space<vmem>>, vector<16x32xf32>
    %cst = arith.constant dense<0.000000e+00> : vector<16x384xf32>
    %7 = tpu.matmul %6, %0, %cst {dimension_numbers = #tpu.dot_dimension_numbers<[1], [0], [0], [1], [0, 0, 1, 1], [], []>} : vector<16x32xf32>, vector<32x384xf32>, vector<16x384xf32> -> vector<16x384xf32>
    %8 = vector.broadcast %1 : vector<1x384xf32> to vector<16x384xf32>
    %9 = arith.addf %7, %8 : vector<16x384xf32>
    %10 = vector.extract_strided_slice %9 {offsets = [0, 0], sizes = [16, 128], strides = [1, 1]} : vector<16x384xf32> to vector<16x128xf32>
    %11 = vector.extract_strided_slice %9 {offsets = [0, 128], sizes = [16, 128], strides = [1, 1]} : vector<16x384xf32> to vector<16x128xf32>
    %12 = vector.extract_strided_slice %9 {offsets = [0, 256], sizes = [16, 128], strides = [1, 1]} : vector<16x384xf32> to vector<16x128xf32>
    %13 = vector.extract_strided_slice %11 {offsets = [0, 0], sizes = [8, 128], strides = [1, 1]} : vector<16x128xf32> to vector<8x128xf32>
    %14 = vector.extract_strided_slice %12 {offsets = [0, 0], sizes = [8, 128], strides = [1, 1]} : vector<16x128xf32> to vector<8x128xf32>
    %15 = tpu.concatenate %13, %13 in 0 : vector<8x128xf32>, vector<8x128xf32> -> vector<16x128xf32>
    %16 = tpu.concatenate %14, %14 in 0 : vector<8x128xf32>, vector<8x128xf32> -> vector<16x128xf32>
    %17 = arith.mulf %10, %15 : vector<16x128xf32>
    %cst_9 = arith.constant dense<0.000000e+00> : vector<16x128xf32>
    %18 = tpu.matmul %17, %3, %cst_9 {dimension_numbers = #tpu.dot_dimension_numbers<[1], [0], [0], [1], [0, 0, 1, 1], [], []>} : vector<16x128xf32>, vector<128x128xf32>, vector<16x128xf32> -> vector<16x128xf32>
    %19 = vector.extract_strided_slice %11 {offsets = [8, 0], sizes = [8, 128], strides = [1, 1]} : vector<16x128xf32> to vector<8x128xf32>
    %20 = vector.extract_strided_slice %12 {offsets = [8, 0], sizes = [8, 128], strides = [1, 1]} : vector<16x128xf32> to vector<8x128xf32>
    %21 = tpu.concatenate %19, %19 in 0 : vector<8x128xf32>, vector<8x128xf32> -> vector<16x128xf32>
    %22 = tpu.concatenate %20, %20 in 0 : vector<8x128xf32>, vector<8x128xf32> -> vector<16x128xf32>
    %23 = arith.mulf %10, %21 : vector<16x128xf32>
    %cst_10 = arith.constant dense<0.000000e+00> : vector<16x128xf32>
    %24 = tpu.matmul %23, %3, %cst_10 {dimension_numbers = #tpu.dot_dimension_numbers<[1], [0], [0], [1], [0, 0, 1, 1], [], []>} : vector<16x128xf32>, vector<128x128xf32>, vector<16x128xf32> -> vector<16x128xf32>
    %25 = arith.maximumf %18, %24 : vector<16x128xf32>
    %26 = arith.subf %18, %25 : vector<16x128xf32>
    %27 = math.exp %26 : vector<16x128xf32>
    %28 = arith.subf %24, %25 : vector<16x128xf32>
    %29 = math.exp %28 : vector<16x128xf32>
    %30 = arith.addf %27, %29 : vector<16x128xf32>
    %31 = tpu.reciprocal %30 : vector<16x128xf32> -> vector<16x128xf32>
    %32 = arith.mulf %27, %31 : vector<16x128xf32>
    %cst_11 = arith.constant dense<0.000000e+00> : vector<16x128xf32>
    %33 = tpu.matmul %32, %4, %cst_11 {dimension_numbers = #tpu.dot_dimension_numbers<[1], [0], [0], [1], [0, 0, 1, 1], [], []>} : vector<16x128xf32>, vector<128x128xf32>, vector<16x128xf32> -> vector<16x128xf32>
    %34 = arith.mulf %33, %16 : vector<16x128xf32>
    %35 = arith.mulf %29, %31 : vector<16x128xf32>
    %cst_12 = arith.constant dense<0.000000e+00> : vector<16x128xf32>
    %36 = tpu.matmul %35, %4, %cst_12 {dimension_numbers = #tpu.dot_dimension_numbers<[1], [0], [0], [1], [0, 0, 1, 1], [], []>} : vector<16x128xf32>, vector<128x128xf32>, vector<16x128xf32> -> vector<16x128xf32>
    %37 = arith.mulf %36, %22 : vector<16x128xf32>
    %38 = arith.addf %34, %37 : vector<16x128xf32>
    %cst_13 = arith.constant dense<0.000000e+00> : vector<16x128xf32>
    %39 = tpu.matmul %38, %2, %cst_13 {dimension_numbers = #tpu.dot_dimension_numbers<[1], [0], [0], [1], [0, 0, 1, 1], [], []>} : vector<16x128xf32>, vector<128x128xf32>, vector<16x128xf32> -> vector<16x128xf32>
    %40 = vector.broadcast %5 : vector<1x128xf32> to vector<16x128xf32>
    %41 = arith.addf %39, %40 : vector<16x128xf32>
    %c0_14 = arith.constant 0 : index
    %c0_15 = arith.constant 0 : index
    %42 = vector.load %arg3[%c0_14, %c0_15] : memref<16x128xf32, #tpu.memory_space<vmem>>, vector<16x128xf32>
    tpu.vector_store %arg3[%c0_14, %c0_15], %41 {strides = array<i32>} : memref<16x128xf32, #tpu.memory_space<vmem>>, vector<16x128xf32>,
    return
  }
}

</mosaic_0001>

<llo_original>
// kernel: timevar_kp_forward.2
$region0: #{timevar_kp_forward.2}
  #allocation0 [shape = 'u32[]', space=smem, size = 0x4, offset = 0x4, fixed_abs, tag = 'smem constant byte address 0x4 - core index']
  #allocation1 [shape = 'u32[144,128]{1,0:T(1,128)}', space=vmem, size = 0x12000, scoped, tag = 'internal scratch']
  #allocation2 [shape = 'u32[2048]{0}', space=vmem, size = 0x2000, scoped, tag = 'scoped memory for timevar_kp_forward.2']
  #allocation3 [shape = 'u32[2048]{0}', space=vmem, size = 0x2000, scoped, tag = 'scoped memory for timevar_kp_forward.2']
  #allocation4 [shape = 'u32[2048]{0}', space=vmem, size = 0x2000, scoped, tag = 'scoped memory for timevar_kp_forward.2']
  #allocation5 [shape = 'u32[2048]{0}', space=vmem, size = 0x2000, scoped, tag = 'scoped memory for timevar_kp_forward.2']
  #allocation6 [shape = 'u32[2048]{0}', space=vmem, size = 0x2000, scoped, tag = 'scoped memory for timevar_kp_forward.2']
  %s0 = inlined_call_operand.vmem [shape: f32[40,384], index: 0, kind: input, shape index: {}]
  %s1 = inlined_call_operand.hbm [shape: f32[392,128], index: 1, kind: input, shape index: {}]
  %s2 = inlined_call_operand.vmem [shape: f32[2,3,32], index: 2, kind: input, shape index: {}]
  %s3 = inlined_call_operand.<no memory space> [shape: f32[], index: 3, kind: input, shape index: {}]
  %s4 = inlined_call_operand.vmem [shape: f32[16,128], index: 4, kind: output, shape index: {}]
  %s5 = sld [smem:[#allocation0]]
  $region26: #{timevar_kp_forward.2} parent=0
    _
  %s7 = ssub.s32 1, %s5
  %s8 = scalar_select 0, %s7, %s5
  %v9 = vstv %s3
  $region1: #{timevar_kp_forward.2} parent=0
    #allocation7 [shape = 'u8[200704]{0}', space=vmem, size = 0x31000, scoped, tag = 'input window, operand 2, single buffered']
    #allocation8 [shape = 's32[1]{0}', space=sflag, size = 0x4, scoped, tag = 'scoped memory for timevar_kp_forward.2']
    #allocation9 [shape = 'u8[8192]{0}', space=vmem, size = 0x2000, dematerialized = true, scoped, tag = 'FusionAdapter Buffer %fusion.1 = f32[16,32]{1,0:T(8,128)} fusion(%param_2.2, %param_3), kind=kLoop, calls=%fused_computation.1.clone, metadata={op_name="jit(timevar_kp_forward)/reshape" stack_frame_id=11}']
    %10 = vsyncpa [#allocation8], 0
    // Predicated region
    $region2: #{timevar_kp_forward.2} parent=1 // pred_check
      _
    $region3: #{timevar_kp_forward.2} parent=1 // pred_check_branch
      %12 = sbr.rel (0) target = $region5
    $region4: #{timevar_kp_forward.2} parent=1 // pred_region
      _
    $region5: #{timevar_kp_forward.2} parent=1 // pred_fallthru
      _
    // Predicated region
    $region6: #{timevar_kp_forward.2} parent=1 // pred_check
      _
    $region7: #{timevar_kp_forward.2} parent=1 // pred_check_branch
      %14 = sbr.rel (0) target = $region9
    $region8: #{timevar_kp_forward.2} parent=1 // pred_region
      _
    $region9: #{timevar_kp_forward.2} parent=1 // pred_fallthru
      _
    // Predicated region
    $region10: #{timevar_kp_forward.2} parent=1 // pred_check
      _
    $region11: #{timevar_kp_forward.2} parent=1 // pred_check_branch
      %16 = sbr.rel (0) target = $region13
    $region12: #{timevar_kp_forward.2} parent=1 // pred_region
      %s18 = ssub.s32 6272, 6272
      %19 = vsyncadd [#allocation8], %s18
      %s20 = sshll.u32 [#allocation7], 4
      %s21 = int_to_ptr.vmem [resolvable:$true] %s20
      %26 = dma.hbm_to_vmem [thread:$0]  %s1, 6272, %s21, [#allocation8], 128, 128, 8
    $region13: #{timevar_kp_forward.2} parent=1 // pred_fallthru
      _
    // Predicated region
    $region14: #{timevar_kp_forward.2} parent=1 // pred_check
      _
    $region15: #{timevar_kp_forward.2} parent=1 // pred_check_branch
      %28 = sbr.rel (0) target = $region17
    $region16: #{timevar_kp_forward.2} parent=1 // pred_region
      %29 = dma.done [#allocation8], 6272
    $region17: #{timevar_kp_forward.2} parent=1 // pred_fallthru
      _
    %v30 = vld [vmem:[%s2] sm:$0x7]
    %v31 = vlaneseq
    %v32 = vshrl.u32 %v31, 7
    %vm34 = vcmp.lt.s32.totalorder %v32, 3
    %v35 = vsel %vm34, %v30, %v9
    %v36 = vlaneseq
    %v37 = vand.u32 %v36, 127
    %vm39 = vcmp.lt.s32.totalorder %v37, 32
    %v40 = vsel %vm39, %v35, %v9
    %42 = vst [vmem:[#allocation9] sm:$0xff] %v40
    %s43 = scalar_lea.vmem %s2, 4
    %v44 = vld [vmem:[%s43] sm:$0x7]
    %v45 = vlaneseq
    %v46 = vshrl.u32 %v45, 7
    %vm48 = vcmp.lt.s32.totalorder %v46, 3
    %v49 = vsel %vm48, %v44, %v9
    %v50 = vlaneseq
    %v51 = vand.u32 %v50, 127
    %vm53 = vcmp.lt.s32.totalorder %v51, 32
    %v54 = vsel %vm53, %v49, %v9
    %s55 = scalar_lea.vmem [#allocation9], 8
    %57 = vst [vmem:[%s55] sm:$0xff] %v54
    %v58 = vld [vmem:[%s0] sm:$0xff]
    %v59 = vld [vmem:[%s0 + $0x8] sm:$0xff]
    %v60 = vld [vmem:[%s0 + $0x10] sm:$0xff]
    %v61 = vld [vmem:[%s0 + $0x18] sm:$0xff]
    %v62 = vld [vmem:[%s0 + $0x20] sm:$0xff]
    %v63 = vld [vmem:[%s0 + $0x28] sm:$0xff]
    %v64 = vld [vmem:[%s0 + $0x30] sm:$0xff]
    %v65 = vld [vmem:[%s0 + $0x38] sm:$0xff]
    %v66 = vld [vmem:[%s0 + $0x40] sm:$0xff]
    %v67 = vld [vmem:[%s0 + $0x48] sm:$0xff]
    %v68 = vld [vmem:[%s0 + $0x50] sm:$0xff]
    %v69 = vld [vmem:[%s0 + $0x58] sm:$0xff]
    %s70 = scalar_lea.vmem %s0, 96
    %v71 = vld [vmem:[%s70] ss:$8 sm:$0x7]
    %v72 = vld [vmem:[#allocation7] sm:$0xff]
    %v73 = vld [vmem:[#allocation7 + $0x8] sm:$0xff]
    %v74 = vld [vmem:[#allocation7 + $0x10] sm:$0xff]
    %v75 = vld [vmem:[#allocation7 + $0x18] sm:$0xff]
    %v76 = vld [vmem:[#allocation7 + $0x20] sm:$0xff]
    %v77 = vld [vmem:[#allocation7 + $0x28] sm:$0xff]
    %v78 = vld [vmem:[#allocation7 + $0x30] sm:$0xff]
    %v79 = vld [vmem:[#allocation7 + $0x38] sm:$0xff]
    %v80 = vld [vmem:[#allocation7 + $0x40] sm:$0xff]
    %v81 = vld [vmem:[#allocation7 + $0x48] sm:$0xff]
    %v82 = vld [vmem:[#allocation7 + $0x50] sm:$0xff]
    %v83 = vld [vmem:[#allocation7 + $0x58] sm:$0xff]
    %v84 = vld [vmem:[#allocation7 + $0x60] sm:$0xff]
    %v85 = vld [vmem:[#allocation7 + $0x68] sm:$0xff]
    %v86 = vld [vmem:[#allocation7 + $0x70] sm:$0xff]
    %v87 = vld [vmem:[#allocation7 + $0x78] sm:$0xff]
    %v88 = vld [vmem:[#allocation7 + $0x80] sm:$0xff]
    %v89 = vld [vmem:[#allocation7 + $0x88] sm:$0xff]
    %v90 = vld [vmem:[#allocation7 + $0x90] sm:$0xff]
    %v91 = vld [vmem:[#allocation7 + $0x98] sm:$0xff]
    %v92 = vld [vmem:[#allocation7 + $0xa0] sm:$0xff]
    %v93 = vld [vmem:[#allocation7 + $0xa8] sm:$0xff]
    %v94 = vld [vmem:[#allocation7 + $0xb0] sm:$0xff]
    %v95 = vld [vmem:[#allocation7 + $0xb8] sm:$0xff]
    %v96 = vld [vmem:[#allocation7 + $0xc0] sm:$0xff]
    %v97 = vld [vmem:[#allocation7 + $0xc8] sm:$0xff]
    %v98 = vld [vmem:[#allocation7 + $0xd0] sm:$0xff]
    %v99 = vld [vmem:[#allocation7 + $0xd8] sm:$0xff]
    %v100 = vld [vmem:[#allocation7 + $0xe0] sm:$0xff]
    %v101 = vld [vmem:[#allocation7 + $0xe8] sm:$0xff]
    %v102 = vld [vmem:[#allocation7 + $0xf0] sm:$0xff]
    %v103 = vld [vmem:[#allocation7 + $0xf8] sm:$0xff]
    %v104 = vld [vmem:[#allocation7 + $0x100] sm:$0xff]
    %v105 = vld [vmem:[#allocation7 + $0x108] sm:$0xff]
    %v106 = vld [vmem:[#allocation7 + $0x110] sm:$0xff]
    %v107 = vld [vmem:[#allocation7 + $0x118] sm:$0xff]
    %v108 = vld [vmem:[#allocation7 + $0x120] sm:$0xff]
    %v109 = vld [vmem:[#allocation7 + $0x128] sm:$0xff]
    %v110 = vld [vmem:[#allocation7 + $0x130] sm:$0xff]
    %v111 = vld [vmem:[#allocation7 + $0x138] sm:$0xff]
    %v112 = vld [vmem:[#allocation7 + $0x140] sm:$0xff]
    %v113 = vld [vmem:[#allocation7 + $0x148] sm:$0xff]
    %v114 = vld [vmem:[#allocation7 + $0x150] sm:$0xff]
    %v115 = vld [vmem:[#allocation7 + $0x158] sm:$0xff]
    %v116 = vld [vmem:[#allocation7 + $0x160] sm:$0xff]
    %v117 = vld [vmem:[#allocation7 + $0x168] sm:$0xff]
    %v118 = vld [vmem:[#allocation7 + $0x170] sm:$0xff]
    %v119 = vld [vmem:[#allocation7 + $0x178] sm:$0xff]
    %v120 = vld [vmem:[#allocation7 + $0x180] sm:$0x1]
    %v121 = vld [vmem:[#allocation9] sm:$0xff]
    %v122 = vld [vmem:[#allocation9 + $0x8] sm:$0xff]
    %v124 = vlaneseq
    %v125 = vshrl.u32 %v124, 7
    %v126 = vsub.s32 0, %v125
    %v127 = vrot.slane %v71, %v126
    %v128 = vlaneseq
    %v129 = vshrl.u32 %v128, 7
    %v130 = vsub.s32 1, %v129
    %v131 = vrot.slane %v71, %v130
    %v132 = vlaneseq
    %v133 = vshrl.u32 %v132, 7
    %v134 = vsub.s32 2, %v133
    %v135 = vrot.slane %v71, %v134
    %vm139 = vcmask 261120
    %v141 = vsel %vm139, %v121, 0
    %v144 = vsel %vm139, %v122, 0
    %146 = vmatprep.subr.mxu0 %v59
    %147 = vmatpush1.msra.mxu0 %v58
    %148 = vmatprep.subr.mxu0 %v62
    %149 = vmatpush1.msra.mxu0 %v61
    %150 = vmatprep.subr.mxu0 %v65
    %151 = vmatpush1.msra.mxu0 %v64
    %152 = vmatprep.subr.mxu0 %v68
    %153 = vmatpush1.msra.mxu0 %v67
    %154 = vmatprep.subr.mxu0 0.0
    %155 = vmatpush1.msra.mxu0 0.0
    %156 = vmatprep.subr.mxu0 0.0
    %157 = vmatpush1.msra.mxu0 0.0
    %158 = vmatprep.subr.mxu0 0.0
    %159 = vmatpush1.msra.mxu0 0.0
    %160 = vmatprep.subr.mxu0 0.0
    %161 = vmatpush1.msra.mxu0 0.0
    %162 = vmatprep.subr.mxu0 0.0
    %163 = vmatpush1.msra.mxu0 0.0
    %164 = vmatprep.subr.mxu0 0.0
    %165 = vmatpush1.msra.mxu0 0.0
    %166 = vmatprep.subr.mxu0 0.0
    %167 = vmatpush1.msra.mxu0 0.0
    %168 = vmatprep.subr.mxu0 0.0
    %169 = vmatpush1.msra.mxu0 0.0
    %170 = vmatprep.subr.mxu0 0.0
    %171 = vmatpush1.msra.mxu0 0.0
    %172 = vmatprep.subr.mxu0 0.0
    %173 = vmatpush1.msra.mxu0 0.0
    %174 = vmatprep.subr.mxu0 0.0
    %175 = vmatpush1.msra.mxu0 0.0
    %176 = vmatprep.subr.mxu0 0.0
    %177 = vmatpush1.msra.mxu0 0.0
    %178 = vmatprep.subr.mxu0 0.0
    %179 = vmatpush1.msra.mxu0 0.0
    %180 = vmatprep.subr.mxu0 0.0
    %181 = vmatpush1.msra.mxu0 0.0
    %182 = vmatprep.subr.mxu0 0.0
    %183 = vmatpush1.msra.mxu0 0.0
    %184 = vmatprep.subr.mxu0 0.0
    %185 = vmatpush1.msra.mxu0 0.0
    %186 = vmatprep.subr.mxu0 0.0
    %187 = vmatpush1.msra.mxu0 0.0
    %188 = vmatprep.subr.mxu0 0.0
    %189 = vmatpush1.msra.mxu0 0.0
    %190 = vmatprep.subr.mxu0 0.0
    %191 = vmatpush1.msra.mxu0 0.0
    %192 = vmatprep.subr.mxu0 0.0
    %193 = vmatpush1.msra.mxu0 0.0
    %194 = vmatprep.subr.mxu0 0.0
    %195 = vmatpush1.msra.mxu0 0.0
    %196 = vmatprep.subr.mxu0 0.0
    %197 = vmatpush1.msra.mxu0 0.0
    %198 = vmatprep.subr.mxu0 0.0
    %199 = vmatpush1.msra.mxu0 0.0
    %200 = vmatprep.subr.mxu0 0.0
    %201 = vmatpush1.msra.mxu0 0.0
    %202 = vmatprep.subr.mxu0 0.0
    %203 = vmatpush1.msra.mxu0 0.0
    %204 = vmatprep.subr.mxu0 0.0
    %205 = vmatpush1.msra.mxu0 0.0
    %206 = vmatprep.subr.mxu0 0.0
    %207 = vmatpush1.msra.mxu0 0.0
    %208 = vmatprep.subr.mxu0 0.0
    %209 = vmatpush1.msra.mxu0 0.0
    %210 = vmatprep.mubr.f32.mxu0 0.0
    %211 = vmatmul.mubr.f32.gmra.mrb[0].mxu0 %v141
    %v212 = vpop.f32.mrb[0].mxu0
    %v213 = vadd.f32 %v127, %v212
    %v214 = vpop.f32.mrb[0].mxu0
    %v215 = vadd.f32 %v131, %v214
    %216 = vmatprep.mubr.f32.mxu0 0.0
    %217 = vmatmul.mubr.f32.gmra.mrb[0].mxu0 %v144
    %v218 = vpop.f32.mrb[0].mxu0
    %v219 = vadd.f32 %v127, %v218
    %v220 = vpop.f32.mrb[0].mxu0
    %v221 = vadd.f32 %v131, %v220
    %222 = vdwg.mxu0
    %223 = vmatprep.subr.mxu0 0.0
    %224 = vmatpush1.msra.mxu0 %v60
    %225 = vmatprep.subr.mxu0 0.0
    %226 = vmatpush1.msra.mxu0 %v63
    %227 = vmatprep.subr.mxu0 0.0
    %228 = vmatpush1.msra.mxu0 %v66
    %229 = vmatprep.subr.mxu0 0.0
    %230 = vmatpush1.msra.mxu0 %v69
    %231 = vmatprep.subr.mxu0 0.0
    %232 = vmatpush1.msra.mxu0 0.0
    %233 = vmatprep.subr.mxu0 0.0
    %234 = vmatpush1.msra.mxu0 0.0
    %235 = vmatprep.subr.mxu0 0.0
    %236 = vmatpush1.msra.mxu0 0.0
    %237 = vmatprep.subr.mxu0 0.0
    %238 = vmatpush1.msra.mxu0 0.0
    %239 = vmatprep.subr.mxu0 0.0
    %240 = vmatpush1.msra.mxu0 0.0
    %241 = vmatprep.subr.mxu0 0.0
    %242 = vmatpush1.msra.mxu0 0.0
    %243 = vmatprep.subr.mxu0 0.0
    %244 = vmatpush1.msra.mxu0 0.0
    %245 = vmatprep.subr.mxu0 0.0
    %246 = vmatpush1.msra.mxu0 0.0
    %247 = vmatprep.subr.mxu0 0.0
    %248 = vmatpush1.msra.mxu0 0.0
    %249 = vmatprep.subr.mxu0 0.0
    %250 = vmatpush1.msra.mxu0 0.0
    %251 = vmatprep.subr.mxu0 0.0
    %252 = vmatpush1.msra.mxu0 0.0
    %253 = vmatprep.subr.mxu0 0.0
    %254 = vmatpush1.msra.mxu0 0.0
    %255 = vmatprep.subr.mxu0 0.0
    %256 = vmatpush1.msra.mxu0 0.0
    %257 = vmatprep.subr.mxu0 0.0
    %258 = vmatpush1.msra.mxu0 0.0
    %259 = vmatprep.subr.mxu0 0.0
    %260 = vmatpush1.msra.mxu0 0.0
    %261 = vmatprep.subr.mxu0 0.0
    %262 = vmatpush1.msra.mxu0 0.0
    %263 = vmatprep.subr.mxu0 0.0
    %264 = vmatpush1.msra.mxu0 0.0
    %265 = vmatprep.subr.mxu0 0.0
    %266 = vmatpush1.msra.mxu0 0.0
    %267 = vmatprep.subr.mxu0 0.0
    %268 = vmatpush1.msra.mxu0 0.0
    %269 = vmatprep.subr.mxu0 0.0
    %270 = vmatpush1.msra.mxu0 0.0
    %271 = vmatprep.subr.mxu0 0.0
    %272 = vmatpush1.msra.mxu0 0.0
    %273 = vmatprep.subr.mxu0 0.0
    %274 = vmatpush1.msra.mxu0 0.0
    %275 = vmatprep.subr.mxu0 0.0
    %276 = vmatpush1.msra.mxu0 0.0
    %277 = vmatprep.subr.mxu0 0.0
    %278 = vmatpush1.msra.mxu0 0.0
    %279 = vmatprep.subr.mxu0 0.0
    %280 = vmatpush1.msra.mxu0 0.0
    %281 = vmatprep.subr.mxu0 0.0
    %282 = vmatpush1.msra.mxu0 0.0
    %283 = vmatprep.subr.mxu0 0.0
    %284 = vmatpush1.msra.mxu0 0.0
    %285 = vmatprep.subr.mxu0 0.0
    %286 = vmatpush1.msra.mxu0 0.0
    %287 = vmatprep.mubr.f32.mxu0 0.0
    %288 = vmatmul.mubr.f32.gmra.mrb[0].mxu0 %v141
    %v289 = vpop.f32.mrb[0].mxu0
    %v290 = vadd.f32 %v135, %v289
    %v291 = vpop.f32.mrb[0].mxu0
    %292 = vmatprep.mubr.f32.mxu0 0.0
    %293 = vmatmul.mubr.f32.gmra.mrb[0].mxu0 %v144
    %v294 = vpop.f32.mrb[0].mxu0
    %v295 = vadd.f32 %v135, %v294
    %v296 = vpop.f32.mrb[0].mxu0
    %297 = vdwg.mxu0
    %v298 = vmul.f32 %v213, %v215
    %v299 = vmul.f32 %v219, %v215
    %300 = vmatprep.subr.mxu0 0.0
    %301 = vmatpush1.msra.mxu0 %v88
    %302 = vmatprep.subr.mxu0 0.0
    %303 = vmatpush1.msra.mxu0 %v89
    %304 = vmatprep.subr.mxu0 0.0
    %305 = vmatpush1.msra.mxu0 %v90
    %306 = vmatprep.subr.mxu0 0.0
    %307 = vmatpush1.msra.mxu0 %v91
    %308 = vmatprep.subr.mxu0 0.0
    %309 = vmatpush1.msra.mxu0 %v92
    %310 = vmatprep.subr.mxu0 0.0
    %311 = vmatpush1.msra.mxu0 %v93
    %312 = vmatprep.subr.mxu0 0.0
    %313 = vmatpush1.msra.mxu0 %v94
    %314 = vmatprep.subr.mxu0 0.0
    %315 = vmatpush1.msra.mxu0 %v95
    %316 = vmatprep.subr.mxu0 0.0
    %317 = vmatpush1.msra.mxu0 %v96
    %318 = vmatprep.subr.mxu0 0.0
    %319 = vmatpush1.msra.mxu0 %v97
    %320 = vmatprep.subr.mxu0 0.0
    %321 = vmatpush1.msra.mxu0 %v98
    %322 = vmatprep.subr.mxu0 0.0
    %323 = vmatpush1.msra.mxu0 %v99
    %324 = vmatprep.subr.mxu0 0.0
    %325 = vmatpush1.msra.mxu0 %v100
    %326 = vmatprep.subr.mxu0 0.0
    %327 = vmatpush1.msra.mxu0 %v101
    %328 = vmatprep.subr.mxu0 0.0
    %329 = vmatpush1.msra.mxu0 %v102
    %330 = vmatprep.subr.mxu0 0.0
    %331 = vmatpush1.msra.mxu0 %v103
    %332 = vmatprep.subr.mxu0 0.0
    %333 = vmatpush1.msra.mxu0 0.0
    %334 = vmatprep.subr.mxu0 0.0
    %335 = vmatpush1.msra.mxu0 0.0
    %336 = vmatprep.subr.mxu0 0.0
    %337 = vmatpush1.msra.mxu0 0.0
    %338 = vmatprep.subr.mxu0 0.0
    %339 = vmatpush1.msra.mxu0 0.0
    %340 = vmatprep.subr.mxu0 0.0
    %341 = vmatpush1.msra.mxu0 0.0
    %342 = vmatprep.subr.mxu0 0.0
    %343 = vmatpush1.msra.mxu0 0.0
    %344 = vmatprep.subr.mxu0 0.0
    %345 = vmatpush1.msra.mxu0 0.0
    %346 = vmatprep.subr.mxu0 0.0
    %347 = vmatpush1.msra.mxu0 0.0
    %348 = vmatprep.subr.mxu0 0.0
    %349 = vmatpush1.msra.mxu0 0.0
    %350 = vmatprep.subr.mxu0 0.0
    %351 = vmatpush1.msra.mxu0 0.0
    %352 = vmatprep.subr.mxu0 0.0
    %353 = vmatpush1.msra.mxu0 0.0
    %354 = vmatprep.subr.mxu0 0.0
    %355 = vmatpush1.msra.mxu0 0.0
    %356 = vmatprep.subr.mxu0 0.0
    %357 = vmatpush1.msra.mxu0 0.0
    %358 = vmatprep.subr.mxu0 0.0
    %359 = vmatpush1.msra.mxu0 0.0
    %360 = vmatprep.subr.mxu0 0.0
    %361 = vmatpush1.msra.mxu0 0.0
    %362 = vmatprep.subr.mxu0 0.0
    %363 = vmatpush1.msra.mxu0 0.0
    %364 = vmatprep.mubr.f32.mxu0 0.0
    %365 = vmatmul.mubr.f32.gmra.mrb[0].mxu0 %v298
    %v366 = vpop.f32.mrb[0].mxu0
    %v367 = vadd.f32 0.0, %v366
    %v368 = vpop.f32.mrb[0].mxu0
    %369 = vmatprep.mubr.f32.mxu0 0.0
    %370 = vmatmul.mubr.f32.gmra.mrb[0].mxu0 %v299
    %v371 = vpop.f32.mrb[0].mxu0
    %v372 = vadd.f32 0.0, %v371
    %v373 = vpop.f32.mrb[0].mxu0
    %374 = vdwg.mxu0
    %v375 = vmul.f32 %v213, %v221
    %v376 = vmul.f32 %v219, %v221
    %377 = vmatprep.subr.mxu0 0.0
    %378 = vmatpush1.msra.mxu0 %v88
    %379 = vmatprep.subr.mxu0 0.0
    %380 = vmatpush1.msra.mxu0 %v89
    %381 = vmatprep.subr.mxu0 0.0
    %382 = vmatpush1.msra.mxu0 %v90
    %383 = vmatprep.subr.mxu0 0.0
    %384 = vmatpush1.msra.mxu0 %v91
    %385 = vmatprep.subr.mxu0 0.0
    %386 = vmatpush1.msra.mxu0 %v92
    %387 = vmatprep.subr.mxu0 0.0
    %388 = vmatpush1.msra.mxu0 %v93
    %389 = vmatprep.subr.mxu0 0.0
    %390 = vmatpush1.msra.mxu0 %v94
    %391 = vmatprep.subr.mxu0 0.0
    %392 = vmatpush1.msra.mxu0 %v95
    %393 = vmatprep.subr.mxu0 0.0
    %394 = vmatpush1.msra.mxu0 %v96
    %395 = vmatprep.subr.mxu0 0.0
    %396 = vmatpush1.msra.mxu0 %v97
    %397 = vmatprep.subr.mxu0 0.0
    %398 = vmatpush1.msra.mxu0 %v98
    %399 = vmatprep.subr.mxu0 0.0
    %400 = vmatpush1.msra.mxu0 %v99
    %401 = vmatprep.subr.mxu0 0.0
    %402 = vmatpush1.msra.mxu0 %v100
    %403 = vmatprep.subr.mxu0 0.0
    %404 = vmatpush1.msra.mxu0 %v101
    %405 = vmatprep.subr.mxu0 0.0
    %406 = vmatpush1.msra.mxu0 %v102
    %407 = vmatprep.subr.mxu0 0.0
    %408 = vmatpush1.msra.mxu0 %v103
    %409 = vmatprep.subr.mxu0 0.0
    %410 = vmatpush1.msra.mxu0 0.0
    %411 = vmatprep.subr.mxu0 0.0
    %412 = vmatpush1.msra.mxu0 0.0
    %413 = vmatprep.subr.mxu0 0.0
    %414 = vmatpush1.msra.mxu0 0.0
    %415 = vmatprep.subr.mxu0 0.0
    %416 = vmatpush1.msra.mxu0 0.0
    %417 = vmatprep.subr.mxu0 0.0
    %418 = vmatpush1.msra.mxu0 0.0
    %419 = vmatprep.subr.mxu0 0.0
    %420 = vmatpush1.msra.mxu0 0.0
    %421 = vmatprep.subr.mxu0 0.0
    %422 = vmatpush1.msra.mxu0 0.0
    %423 = vmatprep.subr.mxu0 0.0
    %424 = vmatpush1.msra.mxu0 0.0
    %425 = vmatprep.subr.mxu0 0.0
    %426 = vmatpush1.msra.mxu0 0.0
    %427 = vmatprep.subr.mxu0 0.0
    %428 = vmatpush1.msra.mxu0 0.0
    %429 = vmatprep.subr.mxu0 0.0
    %430 = vmatpush1.msra.mxu0 0.0
    %431 = vmatprep.subr.mxu0 0.0
    %432 = vmatpush1.msra.mxu0 0.0
    %433 = vmatprep.subr.mxu0 0.0
    %434 = vmatpush1.msra.mxu0 0.0
    %435 = vmatprep.subr.mxu0 0.0
    %436 = vmatpush1.msra.mxu0 0.0
    %437 = vmatprep.subr.mxu0 0.0
    %438 = vmatpush1.msra.mxu0 0.0
    %439 = vmatprep.subr.mxu0 0.0
    %440 = vmatpush1.msra.mxu0 0.0
    %441 = vmatprep.mubr.f32.mxu0 0.0
    %442 = vmatmul.mubr.f32.gmra.mrb[0].mxu0 %v375
    %v443 = vpop.f32.mrb[0].mxu0
    %v444 = vadd.f32 0.0, %v443
    %v445 = vpop.f32.mrb[0].mxu0
    %446 = vmatprep.mubr.f32.mxu0 0.0
    %447 = vmatmul.mubr.f32.gmra.mrb[0].mxu0 %v376
    %v448 = vpop.f32.mrb[0].mxu0
    %v449 = vadd.f32 0.0, %v448
    %v450 = vpop.f32.mrb[0].mxu0
    %451 = vdwg.mxu0
    %v452 = vmax.f32 %v367, %v444
    %v453 = vmax.f32 %v372, %v449
    %v454 = vsub.f32 %v367, %v452
    %v455 = vsub.f32 %v372, %v453
    %v456 = vmul.f32 %v454, 1.442695
    %v457 = vpow.pop %v456
    %v458 = vmul.f32 %v455, 1.442695
    %v459 = vpow.pop %v458
    %v460 = vsub.f32 %v444, %v452
    %v461 = vsub.f32 %v449, %v453
    %v462 = vmul.f32 %v460, 1.442695
    %v463 = vpow.pop %v462
    %v464 = vmul.f32 %v461, 1.442695
    %v465 = vpow.pop %v464
    %v466 = vadd.f32 %v457, %v463
    %v467 = vadd.f32 %v459, %v465
    %v468 = vrcp.pop %v466
    %v469 = vrcp.pop %v467
    %v470 = vmul.f32 %v457, %v468
    %v471 = vmul.f32 %v459, %v469
    %472 = vmatprep.subr.mxu0 0.0
    %473 = vmatpush1.msra.mxu0 %v104
    %474 = vmatprep.subr.mxu0 0.0
    %475 = vmatpush1.msra.mxu0 %v105
    %476 = vmatprep.subr.mxu0 0.0
    %477 = vmatpush1.msra.mxu0 %v106
    %478 = vmatprep.subr.mxu0 0.0
    %479 = vmatpush1.msra.mxu0 %v107
    %480 = vmatprep.subr.mxu0 0.0
    %481 = vmatpush1.msra.mxu0 %v108
    %482 = vmatprep.subr.mxu0 0.0
    %483 = vmatpush1.msra.mxu0 %v109
    %484 = vmatprep.subr.mxu0 0.0
    %485 = vmatpush1.msra.mxu0 %v110
    %486 = vmatprep.subr.mxu0 0.0
    %487 = vmatpush1.msra.mxu0 %v111
    %488 = vmatprep.subr.mxu0 0.0
    %489 = vmatpush1.msra.mxu0 %v112
    %490 = vmatprep.subr.mxu0 0.0
    %491 = vmatpush1.msra.mxu0 %v113
    %492 = vmatprep.subr.mxu0 0.0
    %493 = vmatpush1.msra.mxu0 %v114
    %494 = vmatprep.subr.mxu0 0.0
    %495 = vmatpush1.msra.mxu0 %v115
    %496 = vmatprep.subr.mxu0 0.0
    %497 = vmatpush1.msra.mxu0 %v116
    %498 = vmatprep.subr.mxu0 0.0
    %499 = vmatpush1.msra.mxu0 %v117
    %500 = vmatprep.subr.mxu0 0.0
    %501 = vmatpush1.msra.mxu0 %v118
    %502 = vmatprep.subr.mxu0 0.0
    %503 = vmatpush1.msra.mxu0 %v119
    %504 = vmatprep.subr.mxu0 0.0
    %505 = vmatpush1.msra.mxu0 0.0
    %506 = vmatprep.subr.mxu0 0.0
    %507 = vmatpush1.msra.mxu0 0.0
    %508 = vmatprep.subr.mxu0 0.0
    %509 = vmatpush1.msra.mxu0 0.0
    %510 = vmatprep.subr.mxu0 0.0
    %511 = vmatpush1.msra.mxu0 0.0
    %512 = vmatprep.subr.mxu0 0.0
    %513 = vmatpush1.msra.mxu0 0.0
    %514 = vmatprep.subr.mxu0 0.0
    %515 = vmatpush1.msra.mxu0 0.0
    %516 = vmatprep.subr.mxu0 0.0
    %517 = vmatpush1.msra.mxu0 0.0
    %518 = vmatprep.subr.mxu0 0.0
    %519 = vmatpush1.msra.mxu0 0.0
    %520 = vmatprep.subr.mxu0 0.0
    %521 = vmatpush1.msra.mxu0 0.0
    %522 = vmatprep.subr.mxu0 0.0
    %523 = vmatpush1.msra.mxu0 0.0
    %524 = vmatprep.subr.mxu0 0.0
    %525 = vmatpush1.msra.mxu0 0.0
    %526 = vmatprep.subr.mxu0 0.0
    %527 = vmatpush1.msra.mxu0 0.0
    %528 = vmatprep.subr.mxu0 0.0
    %529 = vmatpush1.msra.mxu0 0.0
    %530 = vmatprep.subr.mxu0 0.0
    %531 = vmatpush1.msra.mxu0 0.0
    %532 = vmatprep.subr.mxu0 0.0
    %533 = vmatpush1.msra.mxu0 0.0
    %534 = vmatprep.subr.mxu0 0.0
    %535 = vmatpush1.msra.mxu0 0.0
    %536 = vmatprep.mubr.f32.mxu0 0.0
    %537 = vmatmul.mubr.f32.gmra.mrb[0].mxu0 %v470
    %v538 = vpop.f32.mrb[0].mxu0
    %v539 = vadd.f32 0.0, %v538
    %v540 = vpop.f32.mrb[0].mxu0
    %541 = vmatprep.mubr.f32.mxu0 0.0
    %542 = vmatmul.mubr.f32.gmra.mrb[0].mxu0 %v471
    %v543 = vpop.f32.mrb[0].mxu0
    %v544 = vadd.f32 0.0, %v543
    %v545 = vpop.f32.mrb[0].mxu0
    %546 = vdwg.mxu0
    %v547 = vmul.f32 %v539, %v290
    %v548 = vmul.f32 %v544, %v290
    %v549 = vmul.f32 %v463, %v468
    %v550 = vmul.f32 %v465, %v469
    %551 = vmatprep.subr.mxu0 0.0
    %552 = vmatpush1.msra.mxu0 %v104
    %553 = vmatprep.subr.mxu0 0.0
    %554 = vmatpush1.msra.mxu0 %v105
    %555 = vmatprep.subr.mxu0 0.0
    %556 = vmatpush1.msra.mxu0 %v106
    %557 = vmatprep.subr.mxu0 0.0
    %558 = vmatpush1.msra.mxu0 %v107
    %559 = vmatprep.subr.mxu0 0.0
    %560 = vmatpush1.msra.mxu0 %v108
    %561 = vmatprep.subr.mxu0 0.0
    %562 = vmatpush1.msra.mxu0 %v109
    %563 = vmatprep.subr.mxu0 0.0
    %564 = vmatpush1.msra.mxu0 %v110
    %565 = vmatprep.subr.mxu0 0.0
    %566 = vmatpush1.msra.mxu0 %v111
    %567 = vmatprep.subr.mxu0 0.0
    %568 = vmatpush1.msra.mxu0 %v112
    %569 = vmatprep.subr.mxu0 0.0
    %570 = vmatpush1.msra.mxu0 %v113
    %571 = vmatprep.subr.mxu0 0.0
    %572 = vmatpush1.msra.mxu0 %v114
    %573 = vmatprep.subr.mxu0 0.0
    %574 = vmatpush1.msra.mxu0 %v115
    %575 = vmatprep.subr.mxu0 0.0
    %576 = vmatpush1.msra.mxu0 %v116
    %577 = vmatprep.subr.mxu0 0.0
    %578 = vmatpush1.msra.mxu0 %v117
    %579 = vmatprep.subr.mxu0 0.0
    %580 = vmatpush1.msra.mxu0 %v118
    %581 = vmatprep.subr.mxu0 0.0
    %582 = vmatpush1.msra.mxu0 %v119
    %583 = vmatprep.subr.mxu0 0.0
    %584 = vmatpush1.msra.mxu0 0.0
    %585 = vmatprep.subr.mxu0 0.0
    %586 = vmatpush1.msra.mxu0 0.0
    %587 = vmatprep.subr.mxu0 0.0
    %588 = vmatpush1.msra.mxu0 0.0
    %589 = vmatprep.subr.mxu0 0.0
    %590 = vmatpush1.msra.mxu0 0.0
    %591 = vmatprep.subr.mxu0 0.0
    %592 = vmatpush1.msra.mxu0 0.0
    %593 = vmatprep.subr.mxu0 0.0
    %594 = vmatpush1.msra.mxu0 0.0
    %595 = vmatprep.subr.mxu0 0.0
    %596 = vmatpush1.msra.mxu0 0.0
    %597 = vmatprep.subr.mxu0 0.0
    %598 = vmatpush1.msra.mxu0 0.0
    %599 = vmatprep.subr.mxu0 0.0
    %600 = vmatpush1.msra.mxu0 0.0
    %601 = vmatprep.subr.mxu0 0.0
    %602 = vmatpush1.msra.mxu0 0.0
    %603 = vmatprep.subr.mxu0 0.0
    %604 = vmatpush1.msra.mxu0 0.0
    %605 = vmatprep.subr.mxu0 0.0
    %606 = vmatpush1.msra.mxu0 0.0
    %607 = vmatprep.subr.mxu0 0.0
    %608 = vmatpush1.msra.mxu0 0.0
    %609 = vmatprep.subr.mxu0 0.0
    %610 = vmatpush1.msra.mxu0 0.0
    %611 = vmatprep.subr.mxu0 0.0
    %612 = vmatpush1.msra.mxu0 0.0
    %613 = vmatprep.subr.mxu0 0.0
    %614 = vmatpush1.msra.mxu0 0.0
    %615 = vmatprep.mubr.f32.mxu0 0.0
    %616 = vmatmul.mubr.f32.gmra.mrb[0].mxu0 %v549
    %v617 = vpop.f32.mrb[0].mxu0
    %v618 = vadd.f32 0.0, %v617
    %v619 = vpop.f32.mrb[0].mxu0
    %620 = vmatprep.mubr.f32.mxu0 0.0
    %621 = vmatmul.mubr.f32.gmra.mrb[0].mxu0 %v550
    %v622 = vpop.f32.mrb[0].mxu0
    %v623 = vadd.f32 0.0, %v622
    %v624 = vpop.f32.mrb[0].mxu0
    %625 = vdwg.mxu0
    %v626 = vmul.f32 %v618, %v295
    %v627 = vmul.f32 %v623, %v295
    %v628 = vadd.f32 %v547, %v626
    %v629 = vadd.f32 %v548, %v627
    %v630 = vlaneseq
    %v631 = vshrl.u32 %v630, 7
    %v632 = vsub.s32 0, %v631
    %v633 = vrot.slane %v120, %v632
    %634 = vmatprep.subr.mxu0 0.0
    %635 = vmatpush1.msra.mxu0 %v72
    %636 = vmatprep.subr.mxu0 0.0
    %637 = vmatpush1.msra.mxu0 %v73
    %638 = vmatprep.subr.mxu0 0.0
    %639 = vmatpush1.msra.mxu0 %v74
    %640 = vmatprep.subr.mxu0 0.0
    %641 = vmatpush1.msra.mxu0 %v75
    %642 = vmatprep.subr.mxu0 0.0
    %643 = vmatpush1.msra.mxu0 %v76
    %644 = vmatprep.subr.mxu0 0.0
    %645 = vmatpush1.msra.mxu0 %v77
    %646 = vmatprep.subr.mxu0 0.0
    %647 = vmatpush1.msra.mxu0 %v78
    %648 = vmatprep.subr.mxu0 0.0
    %649 = vmatpush1.msra.mxu0 %v79
    %650 = vmatprep.subr.mxu0 0.0
    %651 = vmatpush1.msra.mxu0 %v80
    %652 = vmatprep.subr.mxu0 0.0
    %653 = vmatpush1.msra.mxu0 %v81
    %654 = vmatprep.subr.mxu0 0.0
    %655 = vmatpush1.msra.mxu0 %v82
    %656 = vmatprep.subr.mxu0 0.0
    %657 = vmatpush1.msra.mxu0 %v83
    %658 = vmatprep.subr.mxu0 0.0
    %659 = vmatpush1.msra.mxu0 %v84
    %660 = vmatprep.subr.mxu0 0.0
    %661 = vmatpush1.msra.mxu0 %v85
    %662 = vmatprep.subr.mxu0 0.0
    %663 = vmatpush1.msra.mxu0 %v86
    %664 = vmatprep.subr.mxu0 0.0
    %665 = vmatpush1.msra.mxu0 %v87
    %666 = vmatprep.subr.mxu0 0.0
    %667 = vmatpush1.msra.mxu0 0.0
    %668 = vmatprep.subr.mxu0 0.0
    %669 = vmatpush1.msra.mxu0 0.0
    %670 = vmatprep.subr.mxu0 0.0
    %671 = vmatpush1.msra.mxu0 0.0
    %672 = vmatprep.subr.mxu0 0.0
    %673 = vmatpush1.msra.mxu0 0.0
    %674 = vmatprep.subr.mxu0 0.0
    %675 = vmatpush1.msra.mxu0 0.0
    %676 = vmatprep.subr.mxu0 0.0
    %677 = vmatpush1.msra.mxu0 0.0
    %678 = vmatprep.subr.mxu0 0.0
    %679 = vmatpush1.msra.mxu0 0.0
    %680 = vmatprep.subr.mxu0 0.0
    %681 = vmatpush1.msra.mxu0 0.0
    %682 = vmatprep.subr.mxu0 0.0
    %683 = vmatpush1.msra.mxu0 0.0
    %684 = vmatprep.subr.mxu0 0.0
    %685 = vmatpush1.msra.mxu0 0.0
    %686 = vmatprep.subr.mxu0 0.0
    %687 = vmatpush1.msra.mxu0 0.0
    %688 = vmatprep.subr.mxu0 0.0
    %689 = vmatpush1.msra.mxu0 0.0
    %690 = vmatprep.subr.mxu0 0.0
    %691 = vmatpush1.msra.mxu0 0.0
    %692 = vmatprep.subr.mxu0 0.0
    %693 = vmatpush1.msra.mxu0 0.0
    %694 = vmatprep.subr.mxu0 0.0
    %695 = vmatpush1.msra.mxu0 0.0
    %696 = vmatprep.subr.mxu0 0.0
    %697 = vmatpush1.msra.mxu0 0.0
    %698 = vmatprep.mubr.f32.mxu0 0.0
    %699 = vmatmul.mubr.f32.gmra.mrb[0].mxu0 %v628
    %v700 = vpop.f32.mrb[0].mxu0
    %v701 = vadd.f32 %v633, %v700
    %v702 = vpop.f32.mrb[0].mxu0
    %703 = vmatprep.mubr.f32.mxu0 0.0
    %704 = vmatmul.mubr.f32.gmra.mrb[0].mxu0 %v629
    %v705 = vpop.f32.mrb[0].mxu0
    %v706 = vadd.f32 %v633, %v705
    %v707 = vpop.f32.mrb[0].mxu0
    %708 = vdwg.mxu0
    %709 = vst [vmem:[%s4] sm:$0xff] %v701
    %710 = vst [vmem:[%s4 + $0x8] sm:$0xff] %v706
    // Predicated region
    $region18: #{timevar_kp_forward.2} parent=1 // pred_check
      _
    $region19: #{timevar_kp_forward.2} parent=1 // pred_check_branch
      %712 = sbr.rel (0) target = $region21
    $region20: #{timevar_kp_forward.2} parent=1 // pred_region
      _
    $region21: #{timevar_kp_forward.2} parent=1 // pred_fallthru
      _
    // Predicated region
    $region22: #{timevar_kp_forward.2} parent=1 // pred_check
      _
    $region23: #{timevar_kp_forward.2} parent=1 // pred_check_branch
      %714 = sbr.rel (0) target = $region25
    $region24: #{timevar_kp_forward.2} parent=1 // pred_region
      _
    $region25: #{timevar_kp_forward.2} parent=1 // pred_fallthru
      _
    %715 = vsyncpa [#allocation8], 1

</llo_original>
